<compile_context>
chip_gen: v7x
topology: tpu7x:2x2x1
jax: 0.10.0
libtpu: 0.0.40
codegen_flags: <defaults>
</compile_context>

<pallas_src>
import functools

import jax
import jax.numpy as jnp
from jax.experimental import pallas as pl
from jax.experimental.pallas import tpu as pltpu


def _round_up(v, m):
    return ((v + m - 1) // m) * m


def _choose_tile_h(H, W, B, per_lane_bytes, max_lanes=1024, min_steps=4,
                   lane_budget=6 * 2 ** 20):
    """Pick tile_h (output rows per grid step).

    Constraints: tile_h | H, tile_h*W a multiple of 128 (lane-dense unmasked
    stores), bounded per-step VMEM footprint.  Prefers the largest tile that
    still leaves >= min_steps total grid steps (pipeline overlap + both v7x
    TensorCores busy); otherwise the smallest valid tile (most steps); falls
    back to whole-image tiles if no candidate exists.
    """
    cands = []
    for th in range(1, H + 1):
        if H % th:
            continue
        thw = th * W
        if thw % 128 or thw > max_lanes or per_lane_bytes * thw > lane_budget:
            continue
        cands.append(th)
    if not cands:
        # TODO(synk): huge images whose W never yields a 128-multiple band
        # fall back to one whole-image tile; add an HW-split path if needed.
        return H
    cands.sort(reverse=True)
    for th in cands:
        if B * (H // th) >= min_steps:
            return th
    return cands[-1]


def _tr_steer_conv_kernel(img_ref, filt_ref, comb_ref, bias_ref, mask_ref,
                          out_ref, *, num_banks, coutp, ksize, pad, width,
                          tile_hw, slab_w, kdim, kdim_pad, apply_relu,
                          mm_dtype):
    # img_ref : (Cin, L)             f32   flat, vertically padded image
    #                                       (+ guards), resident per batch elem
    # filt_ref: (R*Coutp, Kp)        mmdt  all banks stacked along rows
    # comb_ref: (R, tile_hw)         f32   per-pixel bank weights (this band)
    # bias_ref: (Coutp, R)           f32
    # mask_ref: (k, tile_hw)         f32   horizontal-validity masks (per dw)
    # out_ref : (1, Coutp, tile_hw)  f32   lane-dense NCHW-flat output block
    t = pl.program_id(1)
    band = t * tile_hw
    if tile_hw % 128 == 0:
        band = pl.multiple_of(band, 128)

    # One 128-aligned dynamic load of the band + halo; taps are static slices.
    slab = img_ref[:, pl.ds(band, slab_w)]                    # (Cin, slab_w)
    hmask = mask_ref[...]                                      # (k, tile_hw)

    chunks = []
    for dh in range(ksize):
        for dw in range(ksize):
            off = dh * width + dw
            c = slab[:, off:off + tile_hw]                    # (Cin, tile_hw)
            if dw != pad:   # border taps read neighbouring-row pixels -> mask
                c = c * hmask[dw:dw + 1, :]
            chunks.append(c)
    if kdim_pad > kdim:     # zero rows padding K to the sublane multiple
        chunks.append(jnp.zeros((kdim_pad - kdim, tile_hw), slab.dtype))
    patch = jnp.concatenate(chunks, axis=0).astype(mm_dtype)  # (Kp, tile_hw)

    # Single fused matmul over all banks: (R*Coutp, Kp) @ (Kp, tile_hw).
    y = jnp.dot(filt_ref[...], patch,
                preferred_element_type=jnp.float32)           # (R*Coutp, tile)

    # Fused per-pixel bank combination + bias (+ ReLU) epilogue.
    comb = comb_ref[...]                                      # (R, tile)
    bias = bias_ref[...]                                      # (Coutp, R)
    acc = comb[0:1, :] * (y[0:coutp, :] + bias[:, 0:1])
    for r in range(1, num_banks):
        acc = acc + comb[r:r + 1, :] * (y[r * coutp:(r + 1) * coutp, :]
                                        + bias[:, r:r + 1])
    if apply_relu:
        acc = jnp.maximum(acc, 0.0)
    out_ref[0] = acc.astype(out_ref.dtype)


def relaxed_tr_steer_conv(x, basis_kernels, relaxed_weights, biases,
                          combination_weights, kernel_size, last_layer=False,
                          matmul_dtype=jnp.bfloat16, max_tile_hw=1024):
    """Forward of Relaxed_TR_SteerConv.

    x                  : (B, Cin, H, W)              with Cin = in_frames * q
    basis_kernels      : (num_basis, p, q, k*k)      shared across banks
    relaxed_weights    : (R, out_frames, num_basis, in_frames, k*k)
    biases             : (R, out_frames * p)
    combination_weights: (H, W, R)
    returns            : (B, Cout, H, W)             with Cout = out_frames * p
    """
    B, Cin, H, W = x.shape
    R = relaxed_weights.shape[0]
    k = kernel_size
    kk = k * k
    pad = (k - 1) // 2
    HW = H * W

    # --- filter assembly (host glue; matches torch.einsum + reshape) --------
    # Column order is (tap, cin) to match the in-kernel patch construction.
    filt = jnp.einsum('bpqk,robik->ropkiq', basis_kernels, relaxed_weights,
                      precision=jax.lax.Precision.HIGHEST)
    o, p_dim, i_fr, q = filt.shape[1], filt.shape[2], filt.shape[4], filt.shape[5]
    Cout = o * p_dim
    assert Cin == i_fr * q, "input channels must equal in_frames * q"
    K = kk * Cin

    in_bytes = jnp.dtype(matmul_dtype).itemsize
    k_align = 8 if in_bytes == 4 else 32 // in_bytes      # f32:8, bf16:16, 8bit:32
    Kp = _round_up(K, k_align)
    Coutp = _round_up(Cout, 8)

    filt = filt.reshape(R, Cout, K)
    filt = jnp.pad(filt, ((0, 0), (0, Coutp - Cout), (0, Kp - K)))
    filt_all = filt.reshape(R * Coutp, Kp).astype(matmul_dtype)   # (R*Coutp, Kp)

    bias_t = jnp.pad(biases.reshape(R, Cout), ((0, 0), (0, Coutp - Cout)))
    bias_t = bias_t.T.astype(jnp.float32)                         # (Coutp, R)

    comb_t = jnp.transpose(combination_weights, (2, 0, 1)).reshape(R, HW)
    comb_t = comb_t.astype(jnp.float32)                           # (R, HW)

    # --- adaptive, lane-dense & Cout-aware row-band tiling -------------------
    per_lane = (Kp * (4 + in_bytes)        # patch (f32 chunks + mm-dtype copy)
                + (R + 2) * Coutp * 4      # y + acc + out block
                + (R + k) * 4              # comb + masks
                + Cin * 4)                 # slab halo load
    tile_h = _choose_tile_h(H, W, B, per_lane,
                            max_lanes=max(128, max_tile_hw))
    thw = tile_h * W
    n_bands = H // tile_h

    # --- fused-im2col input layout: flat, vertically padded, with guards ----
    Hp = H + 2 * pad
    slab_w = _round_up(thw + 2 * pad * W + 2 * pad, 128)
    L = (HW - thw) + slab_w               # last band's slab ends exactly at L
    xg = jnp.pad(x, ((0, 0), (0, 0), (pad, pad), (0, 0))).reshape(B, Cin, Hp * W)
    xg = jnp.pad(xg, ((0, 0), (0, 0), (pad, L - pad - Hp * W)))
    xg = xg.astype(jnp.float32)                                    # (B, Cin, L)

    # per-dw horizontal validity masks; identical for every band (band % W == 0)
    wpos = jnp.arange(thw, dtype=jnp.int32) % W
    colmask = jnp.stack(
        [((wpos >= (pad - dw)) & (wpos < (W + pad - dw))).astype(jnp.float32)
         for dw in range(k)], axis=0)                              # (k, thw)

    # --- explicit VMEM budget (double-buffered blocks + kernel temporaries) --
    vmem_need = (2 * Cin * L * 4                    # resident image (f32)
                 + 2 * R * Coutp * Kp * in_bytes    # filters
                 + 2 * R * thw * 4                  # comb
                 + 2 * Coutp * R * 4                # bias
                 + 2 * k * thw * 4                  # masks
                 + 2 * Coutp * thw * 4              # output blocks
                 + Cin * slab_w * 4                 # slab value
                 + Kp * thw * (4 + in_bytes)        # patch (f32 + cast copy)
                 + (R + 1) * Coutp * thw * 4)       # y + acc temporaries
    vmem_limit = int(min(max(2 * vmem_need, 16 * 2 ** 20), 40 * 2 ** 20))

    kernel = functools.partial(
        _tr_steer_conv_kernel, num_banks=R, coutp=Coutp, ksize=k, pad=pad,
        width=W, tile_hw=thw, slab_w=slab_w, kdim=K, kdim_pad=Kp,
        apply_relu=not last_layer, mm_dtype=matmul_dtype)

    out3 = pl.pallas_call(
        kernel,
        out_shape=jax.ShapeDtypeStruct((B, Coutp, HW), jnp.float32),
        grid=(B, n_bands),
        in_specs=[
            pl.BlockSpec((None, Cin, L), lambda b, t: (b, 0, 0)),   # image
            pl.BlockSpec((R * Coutp, Kp), lambda b, t: (0, 0)),     # filters
            pl.BlockSpec((R, thw), lambda b, t: (0, t)),            # comb
            pl.BlockSpec((Coutp, R), lambda b, t: (0, 0)),          # bias
            pl.BlockSpec((k, thw), lambda b, t: (0, 0)),            # masks
        ],
        out_specs=pl.BlockSpec((1, Coutp, thw), lambda b, t: (b, 0, t)),
        compiler_params=pltpu.CompilerParams(
            dimension_semantics=("parallel", "parallel"),
            vmem_limit_bytes=vmem_limit),
    )(xg, filt_all, comb_t, bias_t, colmask)

    # NCHW comes out directly; only a cheap channel slice + reshape remains.
    return out3[:, :Cout, :].reshape(B, Cout, H, W)


def reference_forward(x, basis_kernels, relaxed_weights, biases,
                      combination_weights, kernel_size, last_layer=False):
    """Pure-JAX reference mirroring the PyTorch forward."""
    R = relaxed_weights.shape[0]
    k = kernel_size
    pad = (k - 1) // 2
    filt = jnp.einsum('bpqk,robik->ropiqk', basis_kernels, relaxed_weights,
                      precision=jax.lax.Precision.HIGHEST)
    o, p, i, q = filt.shape[1], filt.shape[2], filt.shape[3], filt.shape[4]
    filt = filt.reshape(R, o * p, i * q, k, k)
    outs = []
    for r in range(R):
        y = jax.lax.conv_general_dilated(
            x, filt[r], window_strides=(1, 1),
            padding=[(pad, pad), (pad, pad)],
            dimension_numbers=('NCHW', 'OIHW', 'NCHW'),
            precision=jax.lax.Precision.HIGHEST)
        y = y + biases[r][None, :, None, None]
        outs.append(y)
    outs = jnp.stack(outs, axis=0)                               # (R,B,Cout,H,W)
    out = jnp.einsum('ijr,rboij->boij', combination_weights, outs,
                     precision=jax.lax.Precision.HIGHEST)
    if not last_layer:
        out = jnp.maximum(out, 0.0)
    return out


if __name__ == "__main__":
    # Module hyperparameters (small, consistent with the PyTorch __init__)
    in_frames, out_frames = 2, 2
    N = 4                      # regular repr -> p = q = N (not first/last layer)
    kernel_size = 3
    num_banks = 2
    H = W = 16
    batch = 2
    num_basis = 6              # synthetic basis count
    last_layer = False

    p_dim = q_dim = N
    Cin = in_frames * q_dim     # 8
    Cout = out_frames * p_dim   # 8

    key = jax.random.PRNGKey(0)
    k_basis, k_w, k_b, k_c, k_x = jax.random.split(key, 5)

    # TODO(synk): deterministic random stand-in for the e2cnn steerable basis.
    basis_kernels = jax.random.normal(
        k_basis, (num_basis, p_dim, q_dim, kernel_size ** 2), dtype=jnp.float32)

    stdv = (1.0 / (in_frames * kernel_size * kernel_size)) ** 0.5
    relaxed_weights = jax.random.uniform(
        k_w, (num_banks, out_frames, num_basis, in_frames, kernel_size ** 2),
        minval=-stdv, maxval=stdv, dtype=jnp.float32)
    biases = jax.random.uniform(
        k_b, (num_banks, out_frames * p_dim),
        minval=-stdv, maxval=stdv, dtype=jnp.float32)
    # per-pixel combination weights (randomized to exercise the spatial mapping)
    combination_weights = jax.random.uniform(
        k_c, (H, W, num_banks), minval=0.0, maxval=1.0, dtype=jnp.float32)
    combination_weights = combination_weights / num_banks

    x = jax.random.normal(k_x, (batch, Cin, H, W), dtype=jnp.float32)

    ref = reference_forward(x, basis_kernels, relaxed_weights, biases,
                            combination_weights, kernel_size,
                            last_layer=last_layer)
    ref = jax.block_until_ready(ref)

    # --- exact-precision path (f32 matmul inputs): tight tolerance ----------
    fwd_f32 = jax.jit(functools.partial(
        relaxed_tr_steer_conv, kernel_size=kernel_size,
        last_layer=last_layer, matmul_dtype=jnp.float32))
    out_f32 = jax.block_until_ready(
        fwd_f32(x, basis_kernels, relaxed_weights, biases, combination_weights))
    assert out_f32.shape == (batch, Cout, H, W), out_f32.shape
    assert jnp.allclose(out_f32, ref, atol=1e-3, rtol=1e-3), \
        float(jnp.max(jnp.abs(out_f32 - ref)))

    # --- perf path (bf16 matmul inputs, f32 accumulation) -------------------
    fwd_bf16 = jax.jit(functools.partial(
        relaxed_tr_steer_conv, kernel_size=kernel_size,
        last_layer=last_layer, matmul_dtype=jnp.bfloat16))
    out_bf16 = jax.block_until_ready(
        fwd_bf16(x, basis_kernels, relaxed_weights, biases, combination_weights))
    assert out_bf16.shape == (batch, Cout, H, W), out_bf16.shape
    assert jnp.allclose(out_bf16, ref, atol=5e-2, rtol=5e-2), \
        float(jnp.max(jnp.abs(out_bf16 - ref)))

    print("KERNEL_OK")
</pallas_src>

<mosaic_0001>
module attributes {stable_mosaic.version = 11 : i64} {
  func.func @_tr_steer_conv_kernel(%arg0: i32, %arg1: i32, %arg2: memref<1x8x384xf32, #tpu.memory_space<vmem>>, %arg3: memref<16x72xf32, #tpu.memory_space<vmem>>, %arg4: memref<2x128xf32, #tpu.memory_space<vmem>>, %arg5: memref<8x2xf32, #tpu.memory_space<vmem>>, %arg6: memref<3x128xf32, #tpu.memory_space<vmem>>, %arg7: memref<1x8x128xf32, #tpu.memory_space<vmem>>) attributes {dimension_semantics = [#tpu.dimension_semantics<parallel>, #tpu.dimension_semantics<parallel>], iteration_bounds = array<i64: 2, 2>, scalar_prefetch = 0 : i64, scratch_operands = 0 : i64, tpu.core_type = #tpu.core_type<tc>, window_params = [{transform_indices = @transform_0, window_bounds = array<i64: 1, 8, 384>}, {pipeline_mode = #tpu.pipeline_mode<synchronous>, transform_indices = @transform_1, window_bounds = array<i64: 16, 72>}, {transform_indices = @transform_2, window_bounds = array<i64: 2, 128>}, {pipeline_mode = #tpu.pipeline_mode<synchronous>, transform_indices = @transform_3, window_bounds = array<i64: 8, 2>}, {pipeline_mode = #tpu.pipeline_mode<synchronous>, transform_indices = @transform_4, window_bounds = array<i64: 3, 128>}, {transform_indices = @transform_5, window_bounds = array<i64: 1, 8, 128>}]} {
    %c128_i32 = arith.constant 128 : i32
    %0 = arith.muli %arg1, %c128_i32 : i32
    %1 = tpu.assume_multiple %0, 128 : i32
    %c0 = arith.constant 0 : index
    %c0_0 = arith.constant 0 : index
    %2 = arith.index_cast %1 : i32 to index
    %3 = vector.load %arg2[%c0, %c0_0, %2] : memref<1x8x384xf32, #tpu.memory_space<vmem>>, vector<1x8x256xf32>
    %4 = vector.shape_cast %3 : vector<1x8x256xf32> to vector<8x256xf32>
    %c0_1 = arith.constant 0 : index
    %c0_2 = arith.constant 0 : index
    %5 = vector.load %arg6[%c0_1, %c0_2] : memref<3x128xf32, #tpu.memory_space<vmem>>, vector<3x128xf32>
    %6 = vector.extract_strided_slice %4 {offsets = [0, 0], sizes = [8, 128], strides = [1, 1]} : vector<8x256xf32> to vector<8x128xf32>
    %7 = vector.extract_strided_slice %5 {offsets = [0, 0], sizes = [1, 128], strides = [1, 1]} : vector<3x128xf32> to vector<1x128xf32>
    %8 = vector.broadcast %7 : vector<1x128xf32> to vector<8x128xf32>
    %9 = arith.mulf %6, %8 : vector<8x128xf32>
    %10 = vector.extract_strided_slice %4 {offsets = [0, 1], sizes = [8, 128], strides = [1, 1]} : vector<8x256xf32> to vector<8x128xf32>
    %11 = vector.extract_strided_slice %4 {offsets = [0, 2], sizes = [8, 128], strides = [1, 1]} : vector<8x256xf32> to vector<8x128xf32>
    %12 = vector.extract_strided_slice %5 {offsets = [2, 0], sizes = [1, 128], strides = [1, 1]} : vector<3x128xf32> to vector<1x128xf32>
    %13 = vector.broadcast %12 : vector<1x128xf32> to vector<8x128xf32>
    %14 = arith.mulf %11, %13 : vector<8x128xf32>
    %15 = vector.extract_strided_slice %4 {offsets = [0, 16], sizes = [8, 128], strides = [1, 1]} : vector<8x256xf32> to vector<8x128xf32>
    %16 = vector.extract_strided_slice %5 {offsets = [0, 0], sizes = [1, 128], strides = [1, 1]} : vector<3x128xf32> to vector<1x128xf32>
    %17 = vector.broadcast %16 : vector<1x128xf32> to vector<8x128xf32>
    %18 = arith.mulf %15, %17 : vector<8x128xf32>
    %19 = vector.extract_strided_slice %4 {offsets = [0, 17], sizes = [8, 128], strides = [1, 1]} : vector<8x256xf32> to vector<8x128xf32>
    %20 = vector.extract_strided_slice %4 {offsets = [0, 18], sizes = [8, 128], strides = [1, 1]} : vector<8x256xf32> to vector<8x128xf32>
    %21 = vector.extract_strided_slice %5 {offsets = [2, 0], sizes = [1, 128], strides = [1, 1]} : vector<3x128xf32> to vector<1x128xf32>
    %22 = vector.broadcast %21 : vector<1x128xf32> to vector<8x128xf32>
    %23 = arith.mulf %20, %22 : vector<8x128xf32>
    %24 = vector.extract_strided_slice %4 {offsets = [0, 32], sizes = [8, 128], strides = [1, 1]} : vector<8x256xf32> to vector<8x128xf32>
    %25 = vector.extract_strided_slice %5 {offsets = [0, 0], sizes = [1, 128], strides = [1, 1]} : vector<3x128xf32> to vector<1x128xf32>
    %26 = vector.broadcast %25 : vector<1x128xf32> to vector<8x128xf32>
    %27 = arith.mulf %24, %26 : vector<8x128xf32>
    %28 = vector.extract_strided_slice %4 {offsets = [0, 33], sizes = [8, 128], strides = [1, 1]} : vector<8x256xf32> to vector<8x128xf32>
    %29 = vector.extract_strided_slice %4 {offsets = [0, 34], sizes = [8, 128], strides = [1, 1]} : vector<8x256xf32> to vector<8x128xf32>
    %30 = vector.extract_strided_slice %5 {offsets = [2, 0], sizes = [1, 128], strides = [1, 1]} : vector<3x128xf32> to vector<1x128xf32>
    %31 = vector.broadcast %30 : vector<1x128xf32> to vector<8x128xf32>
    %32 = arith.mulf %29, %31 : vector<8x128xf32>
    %33 = tpu.concatenate %9, %10, %14, %18, %19, %23, %27, %28, %32 in 0 : vector<8x128xf32>, vector<8x128xf32>, vector<8x128xf32>, vector<8x128xf32>, vector<8x128xf32>, vector<8x128xf32>, vector<8x128xf32>, vector<8x128xf32>, vector<8x128xf32> -> vector<72x128xf32>
    %c0_3 = arith.constant 0 : index
    %c0_4 = arith.constant 0 : index
    %34 = vector.load %arg3[%c0_3, %c0_4] : memref<16x72xf32, #tpu.memory_space<vmem>>, vector<16x72xf32>
    %cst = arith.constant dense<0.000000e+00> : vector<16x128xf32>
    %35 = tpu.matmul %34, %33, %cst {dimension_numbers = #tpu.dot_dimension_numbers<[1], [0], [0], [1], [0, 0, 1, 1], [], []>} : vector<16x72xf32>, vector<72x128xf32>, vector<16x128xf32> -> vector<16x128xf32>
    %c0_5 = arith.constant 0 : index
    %c0_6 = arith.constant 0 : index
    %36 = vector.load %arg4[%c0_5, %c0_6] : memref<2x128xf32, #tpu.memory_space<vmem>>, vector<2x128xf32>
    %c0_7 = arith.constant 0 : index
    %c0_8 = arith.constant 0 : index
    %37 = vector.load %arg5[%c0_7, %c0_8] : memref<8x2xf32, #tpu.memory_space<vmem>>, vector<8x2xf32>
    %38 = vector.extract_strided_slice %36 {offsets = [0, 0], sizes = [1, 128], strides = [1, 1]} : vector<2x128xf32> to vector<1x128xf32>
    %39 = vector.extract_strided_slice %35 {offsets = [0, 0], sizes = [8, 128], strides = [1, 1]} : vector<16x128xf32> to vector<8x128xf32>
    %40 = vector.extract_strided_slice %37 {offsets = [0, 0], sizes = [8, 1], strides = [1, 1]} : vector<8x2xf32> to vector<8x1xf32>
    %41 = vector.broadcast %40 : vector<8x1xf32> to vector<8x128xf32>
    %42 = arith.addf %39, %41 : vector<8x128xf32>
    %43 = vector.broadcast %38 : vector<1x128xf32> to vector<8x128xf32>
    %44 = arith.mulf %43, %42 : vector<8x128xf32>
    %45 = vector.extract_strided_slice %36 {offsets = [1, 0], sizes = [1, 128], strides = [1, 1]} : vector<2x128xf32> to vector<1x128xf32>
    %46 = vector.extract_strided_slice %35 {offsets = [8, 0], sizes = [8, 128], strides = [1, 1]} : vector<16x128xf32> to vector<8x128xf32>
    %47 = vector.extract_strided_slice %37 {offsets = [0, 1], sizes = [8, 1], strides = [1, 1]} : vector<8x2xf32> to vector<8x1xf32>
    %48 = vector.broadcast %47 : vector<8x1xf32> to vector<8x128xf32>
    %49 = arith.addf %46, %48 : vector<8x128xf32>
    %50 = vector.broadcast %45 : vector<1x128xf32> to vector<8x128xf32>
    %51 = arith.mulf %50, %49 : vector<8x128xf32>
    %52 = arith.addf %44, %51 : vector<8x128xf32>
    %cst_9 = arith.constant 0.000000e+00 : f32
    %53 = vector.broadcast %cst_9 : f32 to vector<8x128xf32>
    %54 = arith.maximumf %52, %53 : vector<8x128xf32>
    %c0_10 = arith.constant 0 : index
    %c0_11 = arith.constant 0 : index
    %c0_12 = arith.constant 0 : index
    %55 = vector.load %arg7[%c0_10, %c0_11, %c0_12] : memref<1x8x128xf32, #tpu.memory_space<vmem>>, vector<1x8x128xf32>
    %56 = vector.shape_cast %55 : vector<1x8x128xf32> to vector<8x128xf32>
    %57 = vector.shape_cast %54 : vector<8x128xf32> to vector<1x8x128xf32>
    tpu.vector_store %arg7[%c0_10, %c0_11, %c0_12], %57 {strides = array<i32>} : memref<1x8x128xf32, #tpu.memory_space<vmem>>, vector<1x8x128xf32>,
    return
  }
  func.func @transform_0(%arg0: i32, %arg1: i32) -> (i32, i32, i32) {
    %c0_i32 = arith.constant 0 : i32
    %c0_i32_0 = arith.constant 0 : i32
    %c0_i32_1 = arith.constant 0 : i32
    return %arg0, %c0_i32, %c0_i32_0 : i32, i32, i32
  }
  func.func @transform_1(%arg0: i32, %arg1: i32) -> (i32, i32) {
    %c0_i32 = arith.constant 0 : i32
    %c0_i32_0 = arith.constant 0 : i32
    %c0_i32_1 = arith.constant 0 : i32
    return %c0_i32, %c0_i32_0 : i32, i32
  }
  func.func @transform_2(%arg0: i32, %arg1: i32) -> (i32, i32) {
    %c0_i32 = arith.constant 0 : i32
    %c0_i32_0 = arith.constant 0 : i32
    return %c0_i32, %arg1 : i32, i32
  }
  func.func @transform_3(%arg0: i32, %arg1: i32) -> (i32, i32) {
    %c0_i32 = arith.constant 0 : i32
    %c0_i32_0 = arith.constant 0 : i32
    %c0_i32_1 = arith.constant 0 : i32
    return %c0_i32, %c0_i32_0 : i32, i32
  }
  func.func @transform_4(%arg0: i32, %arg1: i32) -> (i32, i32) {
    %c0_i32 = arith.constant 0 : i32
    %c0_i32_0 = arith.constant 0 : i32
    %c0_i32_1 = arith.constant 0 : i32
    return %c0_i32, %c0_i32_0 : i32, i32
  }
  func.func @transform_5(%arg0: i32, %arg1: i32) -> (i32, i32, i32) {
    %c0_i32 = arith.constant 0 : i32
    %c0_i32_0 = arith.constant 0 : i32
    return %arg0, %c0_i32, %arg1 : i32, i32, i32
  }
}

</mosaic_0001>

<llo_original>
// kernel: relaxed_tr_steer_conv.1
$region0: #{relaxed_tr_steer_conv.1}
  #allocation0 [shape = 'u32[]', space=smem, size = 0x4, offset = 0x4, fixed_abs, tag = 'smem constant byte address 0x4 - core index']
  #allocation1 [shape = 'u32[144,128]{1,0:T(1,128)}', space=vmem, size = 0x12000, scoped, tag = 'internal scratch']
  %s0 = inlined_call_operand.vmem [shape: f32[2,8,384], index: 0, kind: input, shape index: {}]
  %s1 = inlined_call_operand.vmem [shape: f32[16,72], index: 1, kind: input, shape index: {}]
  %s2 = inlined_call_operand.vmem [shape: f32[2,256], index: 2, kind: input, shape index: {}]
  %s3 = inlined_call_operand.vmem [shape: f32[8,2], index: 3, kind: input, shape index: {}]
  %s4 = inlined_call_operand.vmem [shape: f32[3,128], index: 4, kind: input, shape index: {}]
  %s5 = inlined_call_operand.vmem [shape: f32[2,8,256], index: 5, kind: output, shape index: {}]
  %s6 = sld [smem:[#allocation0]]
  $region53: #{relaxed_tr_steer_conv.1} parent=0
    _
  %s8 = ssub.s32 1, %s6
  %s9 = scalar_select 0, %s8, %s6
  loop: start=0, step=1, limit=6
  $region2: #{relaxed_tr_steer_conv.1} parent=0 // loop_pre_header
    _
  $region3: #{relaxed_tr_steer_conv.1} parent=0 // loop_header
    %s11 = sphi 0, %s15
    %p12 = scmp.ge.s32.totalorder %s11, 6
    %s18 = sphi 0, %s30
    %s19 = sphi 0, %s26
    %s20 = sphi 0, %s18
    %s21 = sphi 0, %s19
    %s22 = sphi 0, %s20
    %s23 = sphi 0, %s21
    %s33 = sphi 0, %s35
    %s36 = sphi 0, %s33
    %s37 = sphi 0, %s36
    %s53 = sphi 0, %s37
    %s57 = sphi 0, %s57
    %s59 = sphi 0, %s57
    %s60 = sphi 0, %s59
    %s74 = sphi 0, %s60
    %s80 = sphi 0, %s82
    %s83 = sphi 0, %s80
    %s84 = sphi 0, %s83
    %s100 = sphi 0, %s84
    %s104 = sphi 0, %s104
    %s106 = sphi 0, %s104
    %s107 = sphi 0, %s106
    %s121 = sphi 0, %s107
    %s125 = sphi 0, %s125
    %s127 = sphi 0, %s125
    %s128 = sphi 0, %s127
    %s142 = sphi 0, %s128
    %s150 = sphi 0, %s152
    %s153 = sphi 0, %s150
    %s154 = sphi 0, %s153
    %s170 = sphi 0, %s154
  $region4: #{relaxed_tr_steer_conv.1} parent=0 // loop_header_branch
    %14 = sbr.rel (%p12) target = $region8
  $region5: #{relaxed_tr_steer_conv.1} parent=0 // loop_body
    %s16 = ssub.s32 %s11, 1
    %s17 = ssub.s32 %s11, 2
    %s24 = sadd.s32 1, %s19
    %p25 = scmp.ge.s32.totalorder %s24, 2
    %s26 = scalar_select %p25, 0, %s24
    %s27 = sadd.s32 1, %s18
    %s28 = scalar_select %p25, %s27, %s18
    %p29 = scmp.ge.s32.totalorder %s28, 2
    %s30 = scalar_select %p29, 0, %s28
    %s31 = ssub.s32 %s18, %s30
    %p32 = scmp.eq.s32.totalorder %s31, 0
    %s34 = sadd.s32 %s33, 1
    %s35 = scalar_select %p32, %s33, %s34
    %p38 = pneg %p32
    %p39 = scmp.eq.s32.totalorder %s11, 3
    %p40 = por %p38, %p39
    %p41 = scmp.ne.s32.totalorder %s33, %s36
    %p42 = scmp.eq.s32.totalorder %s11, 0
    %p43 = por %p41, %p42
    %p44 = scmp.ne.s32.totalorder %s33, %s36
    %p45 = scmp.eq.s32.totalorder %s16, 3
    %p46 = por %p44, %p45
    %p47 = scmp.ne.s32.totalorder %s36, %s37
    %p48 = scmp.eq.s32.totalorder %s16, 0
    %p49 = por %p47, %p48
    %p50 = scmp.ne.s32.totalorder %s36, %s37
    %p51 = scmp.eq.s32.totalorder %s17, 3
    %p52 = por %p50, %p51
    %p54 = scmp.ne.s32.totalorder %s37, %s53
    %p55 = scmp.eq.s32.totalorder %s17, 0
    %p56 = por %p54, %p55
    %s58 = sadd.s32 %s57, 1
    %p61 = scmp.eq.s32.totalorder %s11, 3
    %p62 = scmp.ne.s32.totalorder %s57, %s59
    %p63 = scmp.eq.s32.totalorder %s11, 0
    %p64 = por %p62, %p63
    %p65 = scmp.ne.s32.totalorder %s57, %s59
    %p66 = scmp.eq.s32.totalorder %s16, 3
    %p67 = por %p65, %p66
    %p68 = scmp.ne.s32.totalorder %s59, %s60
    %p69 = scmp.eq.s32.totalorder %s16, 0
    %p70 = por %p68, %p69
    %p71 = scmp.ne.s32.totalorder %s59, %s60
    %p72 = scmp.eq.s32.totalorder %s17, 3
    %p73 = por %p71, %p72
    %p75 = scmp.ne.s32.totalorder %s60, %s74
    %p76 = scmp.eq.s32.totalorder %s17, 0
    %p77 = por %p75, %p76
    %s78 = ssub.s32 %s19, %s26
    %p79 = scmp.eq.s32.totalorder %s78, 0
    %s81 = sadd.s32 %s80, 1
    %s82 = scalar_select %p79, %s80, %s81
    %p85 = pneg %p79
    %p86 = scmp.eq.s32.totalorder %s11, 3
    %p87 = por %p85, %p86
    %p88 = scmp.ne.s32.totalorder %s80, %s83
    %p89 = scmp.eq.s32.totalorder %s11, 0
    %p90 = por %p88, %p89
    %p91 = scmp.ne.s32.totalorder %s80, %s83
    %p92 = scmp.eq.s32.totalorder %s16, 3
    %p93 = por %p91, %p92
    %p94 = scmp.ne.s32.totalorder %s83, %s84
    %p95 = scmp.eq.s32.totalorder %s16, 0
    %p96 = por %p94, %p95
    %p97 = scmp.ne.s32.totalorder %s83, %s84
    %p98 = scmp.eq.s32.totalorder %s17, 3
    %p99 = por %p97, %p98
    %p101 = scmp.ne.s32.totalorder %s84, %s100
    %p102 = scmp.eq.s32.totalorder %s17, 0
    %p103 = por %p101, %p102
    %s105 = sadd.s32 %s104, 1
    %p108 = scmp.eq.s32.totalorder %s11, 3
    %p109 = scmp.ne.s32.totalorder %s104, %s106
    %p110 = scmp.eq.s32.totalorder %s11, 0
    %p111 = por %p109, %p110
    %p112 = scmp.ne.s32.totalorder %s104, %s106
    %p113 = scmp.eq.s32.totalorder %s16, 3
    %p114 = por %p112, %p113
    %p115 = scmp.ne.s32.totalorder %s106, %s107
    %p116 = scmp.eq.s32.totalorder %s16, 0
    %p117 = por %p115, %p116
    %p118 = scmp.ne.s32.totalorder %s106, %s107
    %p119 = scmp.eq.s32.totalorder %s17, 3
    %p120 = por %p118, %p119
    %p122 = scmp.ne.s32.totalorder %s107, %s121
    %p123 = scmp.eq.s32.totalorder %s17, 0
    %p124 = por %p122, %p123
    %s126 = sadd.s32 %s125, 1
    %p129 = scmp.eq.s32.totalorder %s11, 3
    %p130 = scmp.ne.s32.totalorder %s125, %s127
    %p131 = scmp.eq.s32.totalorder %s11, 0
    %p132 = por %p130, %p131
    %p133 = scmp.ne.s32.totalorder %s125, %s127
    %p134 = scmp.eq.s32.totalorder %s16, 3
    %p135 = por %p133, %p134
    %p136 = scmp.ne.s32.totalorder %s127, %s128
    %p137 = scmp.eq.s32.totalorder %s16, 0
    %p138 = por %p136, %p137
    %p139 = scmp.ne.s32.totalorder %s127, %s128
    %p140 = scmp.eq.s32.totalorder %s17, 3
    %p141 = por %p139, %p140
    %p143 = scmp.ne.s32.totalorder %s128, %s142
    %p144 = scmp.eq.s32.totalorder %s17, 0
    %p145 = por %p143, %p144
    %s146 = ssub.s32 %s18, %s30
    %s147 = ssub.s32 %s19, %s26
    %s148 = sor.u32 %s146, %s147
    %p149 = scmp.eq.s32.totalorder %s148, 0
    %s151 = sadd.s32 %s150, 1
    %s152 = scalar_select %p149, %s150, %s151
    %p155 = pneg %p149
    %p156 = scmp.eq.s32.totalorder %s11, 3
    %p157 = por %p155, %p156
    %p158 = scmp.ne.s32.totalorder %s150, %s153
    %p159 = scmp.eq.s32.totalorder %s11, 0
    %p160 = por %p158, %p159
    %p161 = scmp.ne.s32.totalorder %s150, %s153
    %p162 = scmp.eq.s32.totalorder %s16, 3
    %p163 = por %p161, %p162
    %p164 = scmp.ne.s32.totalorder %s153, %s154
    %p165 = scmp.eq.s32.totalorder %s16, 0
    %p166 = por %p164, %p165
    %p167 = scmp.ne.s32.totalorder %s153, %s154
    %p168 = scmp.eq.s32.totalorder %s17, 3
    %p169 = por %p167, %p168
    %p171 = scmp.ne.s32.totalorder %s154, %s170
    %p172 = scmp.eq.s32.totalorder %s17, 0
    %p173 = por %p171, %p172
    %p174 = scmp.le.s32.totalorder 1, %s11
    %p175 = scmp.lt.s32.totalorder %s11, 5
    %p176 = pnand %p174, %p175
    %p177 = pneg %p176
    // Predicated region
    $region9: #{relaxed_tr_steer_conv.1} parent=5 // pred_check
      _
    $region10: #{relaxed_tr_steer_conv.1} parent=5 // pred_check_branch
      %179 = sbr.rel (%p176) target = $region12
    $region11: #{relaxed_tr_steer_conv.1} parent=5 // pred_region
      %s180 = ssub.s32 %s11, 1
      // Predicated region
      $region13: #{relaxed_tr_steer_conv.1} parent=11 // pred_check
        %p181 = pneg %p70
      $region14: #{relaxed_tr_steer_conv.1} parent=11 // pred_check_branch
        %183 = sbr.rel (%p181) target = $region16
      $region15: #{relaxed_tr_steer_conv.1} parent=11 // pred_region
        _
      $region16: #{relaxed_tr_steer_conv.1} parent=11 // pred_fallthru
        _
      // Predicated region
      $region17: #{relaxed_tr_steer_conv.1} parent=11 // pred_check
        %p184 = pneg %p117
      $region18: #{relaxed_tr_steer_conv.1} parent=11 // pred_check_branch
        %186 = sbr.rel (%p184) target = $region20
      $region19: #{relaxed_tr_steer_conv.1} parent=11 // pred_region
        _
      $region20: #{relaxed_tr_steer_conv.1} parent=11 // pred_fallthru
        _
      // Predicated region
      $region21: #{relaxed_tr_steer_conv.1} parent=11 // pred_check
        %p187 = pneg %p138
      $region22: #{relaxed_tr_steer_conv.1} parent=11 // pred_check_branch
        %189 = sbr.rel (%p187) target = $region24
      $region23: #{relaxed_tr_steer_conv.1} parent=11 // pred_region
        _
      $region24: #{relaxed_tr_steer_conv.1} parent=11 // pred_fallthru
        _
    $region12: #{relaxed_tr_steer_conv.1} parent=5 // pred_fallthru
      _
    %p190 = scmp.lt.s32.totalorder %s11, 4
    // Predicated region
    $region25: #{relaxed_tr_steer_conv.1} parent=5 // pred_check
      %p191 = pneg %p190
    $region26: #{relaxed_tr_steer_conv.1} parent=5 // pred_check_branch
      %193 = sbr.rel (%p191) target = $region28
    $region27: #{relaxed_tr_steer_conv.1} parent=5 // pred_region
      // Predicated region
      $region29: #{relaxed_tr_steer_conv.1} parent=27 // pred_check
        %p194 = pneg %p43
      $region30: #{relaxed_tr_steer_conv.1} parent=27 // pred_check_branch
        %196 = sbr.rel (%p194) target = $region32
      $region31: #{relaxed_tr_steer_conv.1} parent=27 // pred_region
        %p197 = scmp.lt.s32.totalorder %s18, 1
        %s198 = scalar_select %p197, %s18, 1
        %s199 = smul.addr %s198, 3
        %s200 = smul.addr %s199, 8
        %s201 = scalar_lea.vmem %s0, %s200
      $region32: #{relaxed_tr_steer_conv.1} parent=27 // pred_fallthru
        _
      // Predicated region
      $region33: #{relaxed_tr_steer_conv.1} parent=27 // pred_check
        %p202 = pneg %p90
      $region34: #{relaxed_tr_steer_conv.1} parent=27 // pred_check_branch
        %204 = sbr.rel (%p202) target = $region36
      $region35: #{relaxed_tr_steer_conv.1} parent=27 // pred_region
        %p205 = scmp.lt.s32.totalorder %s19, 1
        %s206 = scalar_select %p205, %s19, 1
        %s207 = smul.addr %s206, 2
        %s208 = scalar_lea.vmem %s2, %s207
      $region36: #{relaxed_tr_steer_conv.1} parent=27 // pred_fallthru
        _
    $region28: #{relaxed_tr_steer_conv.1} parent=5 // pred_fallthru
      _
    %p209 = scmp.le.s32.totalorder 1, %s11
    %p210 = scmp.lt.s32.totalorder %s11, 5
    %p211 = pnand %p209, %p210
    %p212 = pneg %p211
    // Predicated region
    $region37: #{relaxed_tr_steer_conv.1} parent=5 // pred_check
      _
    $region38: #{relaxed_tr_steer_conv.1} parent=5 // pred_check_branch
      %214 = sbr.rel (%p211) target = $region40
    $region39: #{relaxed_tr_steer_conv.1} parent=5 // pred_region
      %s215 = ssub.s32 %s11, 1
      %p216 = scmp.lt.s32.totalorder %s20, 1
      %s217 = scalar_select %p216, %s20, 1
      %s218 = smul.addr %s217, 3
      %s219 = smul.addr %s218, 8
      %s220 = scalar_lea.vmem %s0, %s219
      %p221 = pneg %p49
      %p222 = pneg %p46
      %p223 = pneg %p70
      %p224 = pneg %p67
      %p225 = scmp.lt.s32.totalorder %s21, 1
      %s226 = scalar_select %p225, %s21, 1
      %s227 = smul.addr %s226, 2
      %s228 = scalar_lea.vmem %s2, %s227
      %p229 = pneg %p96
      %p230 = pneg %p93
      %p231 = pneg %p117
      %p232 = pneg %p114
      %p233 = pneg %p138
      %p234 = pneg %p135
      %p235 = pneg %p166
      %p236 = pneg %p163
      %p237 = scmp.lt.s32.totalorder %s20, 1
      %s238 = scalar_select %p237, %s20, 1
      %p239 = scmp.lt.s32.totalorder %s21, 1
      %s240 = scalar_select %p239, %s21, 1
      %s241 = smul.addr %s238, 2
      %s242 = sadd.s32 %s240, %s241
      %s243 = smul.addr %s242, 8
      %s244 = scalar_lea.vmem %s5, %s243
      %p245 = scmp.lt.s32.totalorder %s20, 1
      %s246 = scalar_select %p245, %s20, 1
      %s247 = smul.addr %s246, 3
      %s248 = smul.addr %s247, 8
      %s249 = scalar_lea.vmem %s0, %s248
      %p250 = scmp.lt.s32.totalorder %s21, 1
      %s251 = scalar_select %p250, %s21, 1
      %s252 = smul.addr %s251, 2
      %s253 = scalar_lea.vmem %s2, %s252
      %p254 = scmp.lt.s32.totalorder %s20, 1
      %s255 = scalar_select %p254, %s20, 1
      %p256 = scmp.lt.s32.totalorder %s21, 1
      %s257 = scalar_select %p256, %s21, 1
      %s258 = smul.addr %s255, 2
      %s259 = sadd.s32 %s257, %s258
      %s260 = smul.addr %s259, 8
      %s261 = scalar_lea.vmem %s5, %s260
      %s262 = smul.u32 %s21, 128
      %s263 = sshra.s32 %s262, 7
      %s264 = sand.u32 %s262, 127
      %s265 = smul.addr %s263, 8
      %s266 = scalar_lea.vmem %s249, %s265
      %v267 = vld [vmem:[%s266] sm:$0xff]
      %v268 = vld [vmem:[%s266 + $0x8] sm:$0xff]
      %v269 = vld [vmem:[%s4] sm:$0x7]
      %v270 = vlaneseq
      %v271 = vshrl.u32 %v270, 7
      %v272 = vsub.s32 0, %v271
      %v273 = vrot.slane %v269, %v272
      %v274 = vmul.f32 %v267, %v273
      %v275 = vlaneseq
      %v276 = vshrl.u32 %v275, 7
      %v277 = vsub.s32 2, %v276
      %v278 = vrot.slane %v269, %v277
      %280 = vrot.lane.b32.xlu0 %v278, 2
      %v281 = vpop.permute.xlu0 %280
      %v283 = vmul.f32 %v267, %v281
      %v284 = vmul.f32 %v268, %v281
      %286 = vrot.lane.b32.xlu0 %v273, 16
      %v287 = vpop.permute.xlu0 %286
      %v289 = vmul.f32 %v267, %v287
      %v290 = vmul.f32 %v268, %v287
      %291 = vrot.lane.b32.xlu0 %v278, 18
      %v292 = vpop.permute.xlu0 %291
      %v294 = vmul.f32 %v267, %v292
      %v295 = vmul.f32 %v268, %v292
      %296 = vrot.lane.b32.xlu0 %v273, 32
      %v297 = vpop.permute.xlu0 %296
      %v299 = vmul.f32 %v267, %v297
      %v300 = vmul.f32 %v268, %v297
      %301 = vrot.lane.b32.xlu0 %v278, 34
      %v302 = vpop.permute.xlu0 %301
      %v304 = vmul.f32 %v267, %v302
      %v305 = vmul.f32 %v268, %v302
      %308 = vrot.lane.b32.xlu0 %v267, 127
      %v309 = vpop.permute.xlu0 %308
      %310 = vrot.lane.b32.xlu0 %v268, 127
      %v311 = vpop.permute.xlu0 %310
      %vm312 = vcmask 1039360
      %v313 = vsel %vm312, %v309, %v311
      %317 = vrot.lane.b32.xlu0 %v283, 126
      %v318 = vpop.permute.xlu0 %317
      %319 = vrot.lane.b32.xlu0 %v284, 126
      %v320 = vpop.permute.xlu0 %319
      %vm321 = vcmask 1031168
      %v322 = vsel %vm321, %v318, %v320
      %326 = vrot.lane.b32.xlu0 %v289, 112
      %v327 = vpop.permute.xlu0 %326
      %328 = vrot.lane.b32.xlu0 %v290, 112
      %v329 = vpop.permute.xlu0 %328
      %vm330 = vcmask 916480
      %v331 = vsel %vm330, %v327, %v329
      %333 = vrot.lane.b32.xlu0 %v267, 111
      %v334 = vpop.permute.xlu0 %333
      %335 = vrot.lane.b32.xlu0 %v268, 111
      %v336 = vpop.permute.xlu0 %335
      %vm337 = vcmask 908288
      %v338 = vsel %vm337, %v334, %v336
      %342 = vrot.lane.b32.xlu0 %v294, 110
      %v343 = vpop.permute.xlu0 %342
      %344 = vrot.lane.b32.xlu0 %v295, 110
      %v345 = vpop.permute.xlu0 %344
      %vm346 = vcmask 900096
      %v347 = vsel %vm346, %v343, %v345
      %351 = vrot.lane.b32.xlu0 %v299, 96
      %v352 = vpop.permute.xlu0 %351
      %353 = vrot.lane.b32.xlu0 %v300, 96
      %v354 = vpop.permute.xlu0 %353
      %vm355 = vcmask 785408
      %v356 = vsel %vm355, %v352, %v354
      %358 = vrot.lane.b32.xlu0 %v267, 95
      %v359 = vpop.permute.xlu0 %358
      %360 = vrot.lane.b32.xlu0 %v268, 95
      %v361 = vpop.permute.xlu0 %360
      %vm362 = vcmask 777216
      %v363 = vsel %vm362, %v359, %v361
      %367 = vrot.lane.b32.xlu0 %v304, 94
      %v368 = vpop.permute.xlu0 %367
      %369 = vrot.lane.b32.xlu0 %v305, 94
      %v370 = vpop.permute.xlu0 %369
      %vm371 = vcmask 769024
      %v372 = vsel %vm371, %v368, %v370
      %v374 = vld [vmem:[%s1] sm:$0xff]
      %v375 = vld [vmem:[%s1 + $0x8] sm:$0xff]
      %vm376 = vcmask 588800
      %v378 = vsel %vm376, %v374, 0
      %v381 = vsel %vm376, %v375, 0
      %383 = vmatprep.subr.mxu0 0.0
      %384 = vmatpush1.msra.mxu0 %v274
      %385 = vmatprep.subr.mxu0 0.0
      %386 = vmatpush1.msra.mxu0 %v313
      %387 = vmatprep.subr.mxu0 0.0
      %388 = vmatpush1.msra.mxu0 %v322
      %389 = vmatprep.subr.mxu0 0.0
      %390 = vmatpush1.msra.mxu0 %v331
      %391 = vmatprep.subr.mxu0 0.0
      %392 = vmatpush1.msra.mxu0 %v338
      %393 = vmatprep.subr.mxu0 0.0
      %394 = vmatpush1.msra.mxu0 %v347
      %395 = vmatprep.subr.mxu0 0.0
      %396 = vmatpush1.msra.mxu0 %v356
      %397 = vmatprep.subr.mxu0 0.0
      %398 = vmatpush1.msra.mxu0 %v363
      %399 = vmatprep.subr.mxu0 0.0
      %400 = vmatpush1.msra.mxu0 %v372
      %401 = vmatprep.subr.mxu0 0.0
      %402 = vmatpush1.msra.mxu0 0.0
      %403 = vmatprep.subr.mxu0 0.0
      %404 = vmatpush1.msra.mxu0 0.0
      %405 = vmatprep.subr.mxu0 0.0
      %406 = vmatpush1.msra.mxu0 0.0
      %407 = vmatprep.subr.mxu0 0.0
      %408 = vmatpush1.msra.mxu0 0.0
      %409 = vmatprep.subr.mxu0 0.0
      %410 = vmatpush1.msra.mxu0 0.0
      %411 = vmatprep.subr.mxu0 0.0
      %412 = vmatpush1.msra.mxu0 0.0
      %413 = vmatprep.subr.mxu0 0.0
      %414 = vmatpush1.msra.mxu0 0.0
      %415 = vmatprep.subr.mxu0 0.0
      %416 = vmatpush1.msra.mxu0 0.0
      %417 = vmatprep.subr.mxu0 0.0
      %418 = vmatpush1.msra.mxu0 0.0
      %419 = vmatprep.subr.mxu0 0.0
      %420 = vmatpush1.msra.mxu0 0.0
      %421 = vmatprep.subr.mxu0 0.0
      %422 = vmatpush1.msra.mxu0 0.0
      %423 = vmatprep.subr.mxu0 0.0
      %424 = vmatpush1.msra.mxu0 0.0
      %425 = vmatprep.subr.mxu0 0.0
      %426 = vmatpush1.msra.mxu0 0.0
      %427 = vmatprep.subr.mxu0 0.0
      %428 = vmatpush1.msra.mxu0 0.0
      %429 = vmatprep.subr.mxu0 0.0
      %430 = vmatpush1.msra.mxu0 0.0
      %431 = vmatprep.subr.mxu0 0.0
      %432 = vmatpush1.msra.mxu0 0.0
      %433 = vmatprep.subr.mxu0 0.0
      %434 = vmatpush1.msra.mxu0 0.0
      %435 = vmatprep.subr.mxu0 0.0
      %436 = vmatpush1.msra.mxu0 0.0
      %437 = vmatprep.subr.mxu0 0.0
      %438 = vmatpush1.msra.mxu0 0.0
      %439 = vmatprep.subr.mxu0 0.0
      %440 = vmatpush1.msra.mxu0 0.0
      %441 = vmatprep.subr.mxu0 0.0
      %442 = vmatpush1.msra.mxu0 0.0
      %443 = vmatprep.subr.mxu0 0.0
      %444 = vmatpush1.msra.mxu0 0.0
      %445 = vmatprep.subr.mxu0 0.0
      %446 = vmatpush1.msra.mxu0 0.0
      %447 = vmatprep.mubr.f32.mxu0 0.0
      %448 = vmatmul.mubr.f32.gmra.mrb[0].mxu0 %v378
      %v449 = vpop.f32.mrb[0].mxu0
      %v450 = vadd.f32 0.0, %v449
      %v451 = vpop.f32.mrb[0].mxu0
      %452 = vmatprep.mubr.f32.mxu0 0.0
      %453 = vmatmul.mubr.f32.gmra.mrb[0].mxu0 %v381
      %v454 = vpop.f32.mrb[0].mxu0
      %v455 = vadd.f32 0.0, %v454
      %v456 = vpop.f32.mrb[0].mxu0
      %457 = vdwg.mxu0
      %v458 = vld [vmem:[%s253] sm:$0x3]
      %v459 = vld [vmem:[%s3] sm:$0xff]
      %461 = vset.pattern.permute.xlu0 0
      %462 = vperm.xlu0 %461, %v459
      %v463 = vpop.permute.xlu0 %462
      %v465 = vadd.f32 %v450, %v463
      %v466 = vlaneseq
      %v467 = vshrl.u32 %v466, 7
      %v468 = vsub.s32 0, %v467
      %v469 = vrot.slane %v458, %v468
      %v470 = vmul.f32 %v469, %v465
      %471 = vset.pattern.permute.xlu0 1
      %472 = vperm.xlu0 %471, %v459
      %v473 = vpop.permute.xlu0 %472
      %v475 = vadd.f32 %v455, %v473
      %v476 = vlaneseq
      %v477 = vshrl.u32 %v476, 7
      %v478 = vsub.s32 1, %v477
      %v479 = vrot.slane %v458, %v478
      %v480 = vmul.f32 %v479, %v475
      %v481 = vadd.f32 %v470, %v480
      %v482 = vmax.f32 %v481, 0.0
      %483 = vst [vmem:[%s261] sm:$0xff] %v482
      %p484 = scmp.lt.s32.totalorder %s20, 1
      %s485 = scalar_select %p484, %s20, 1
      %p486 = scmp.lt.s32.totalorder %s21, 1
      %s487 = scalar_select %p486, %s21, 1
      %s488 = smul.addr %s485, 2
      %s489 = sadd.s32 %s487, %s488
      %s490 = smul.addr %s489, 8
      %s491 = scalar_lea.vmem %s5, %s490
      // Predicated region
      $region41: #{relaxed_tr_steer_conv.1} parent=39 // pred_check
        %p492 = pneg %p163
      $region42: #{relaxed_tr_steer_conv.1} parent=39 // pred_check_branch
        %494 = sbr.rel (%p492) target = $region44
      $region43: #{relaxed_tr_steer_conv.1} parent=39 // pred_region
        _
      $region44: #{relaxed_tr_steer_conv.1} parent=39 // pred_fallthru
        _
    $region40: #{relaxed_tr_steer_conv.1} parent=5 // pred_fallthru
      _
    %p495 = scmp.le.s32.totalorder 2, %s11
    // Predicated region
    $region45: #{relaxed_tr_steer_conv.1} parent=5 // pred_check
      %p496 = pneg %p495
    $region46: #{relaxed_tr_steer_conv.1} parent=5 // pred_check_branch
      %498 = sbr.rel (%p496) target = $region48
    $region47: #{relaxed_tr_steer_conv.1} parent=5 // pred_region
      %s499 = ssub.s32 %s11, 2
      // Predicated region
      $region49: #{relaxed_tr_steer_conv.1} parent=47 // pred_check
        %p500 = pneg %p169
      $region50: #{relaxed_tr_steer_conv.1} parent=47 // pred_check_branch
        %502 = sbr.rel (%p500) target = $region52
      $region51: #{relaxed_tr_steer_conv.1} parent=47 // pred_region
        %p503 = scmp.lt.s32.totalorder %s22, 1
        %s504 = scalar_select %p503, %s22, 1
        %p505 = scmp.lt.s32.totalorder %s23, 1
        %s506 = scalar_select %p505, %s23, 1
        %s507 = smul.addr %s504, 2
        %s508 = sadd.s32 %s506, %s507
        %s509 = smul.addr %s508, 8
        %s510 = scalar_lea.vmem %s5, %s509
      $region52: #{relaxed_tr_steer_conv.1} parent=47 // pred_fallthru
        _
    $region48: #{relaxed_tr_steer_conv.1} parent=5 // pred_fallthru
      _
  $region6: #{relaxed_tr_steer_conv.1} parent=0 // loop_footer
    %s15 = sadd.s32 1, %s11
  $region7: #{relaxed_tr_steer_conv.1} parent=0 // loop_footer_branch
    %10 = sbr.rel target = $region3
  $region8: #{relaxed_tr_steer_conv.1} parent=0 // loop_exit
    _

</llo_original>
